<compile_context>
chip_gen: v7x
topology: tpu7x:2x2x1
jax: 0.10.0
libtpu: 0.0.40
codegen_flags: <defaults>
</compile_context>

<pallas_src>
import functools

import numpy as np
import jax
import jax.numpy as jnp
from jax.experimental import pallas as pl
from jax.experimental.pallas import tpu as pltpu

# ---------------------------------------------------------------------------
# sym7 reconstruction filters (pywt.Wavelet('sym7').rec_lo / rec_hi), hardcoded
# deterministically (no file / pywt dependency).
# ---------------------------------------------------------------------------
SYM7_REC_LO = np.array([
    0.002681814568257878,
    -0.0010473848886829163,
    -0.01263630340325193,
    0.03051551316596357,
    0.0678926935013727,
    -0.049552834937127255,
    0.017441255086855827,
    0.5361019170917628,
    0.767764317003164,
    0.2886296317515146,
    -0.14004724044296152,
    -0.10780823770381774,
    0.004010244871533663,
    0.010268176708511255,
], dtype=np.float64)
SYM7_DEC_LO = SYM7_REC_LO[::-1].copy()
SYM7_REC_HI = np.array(
    [((-1.0) ** i) * SYM7_DEC_LO[i] for i in range(len(SYM7_DEC_LO))],
    dtype=np.float64)
_L = int(SYM7_REC_LO.shape[0])   # 14


def synthesis_matrix(g, n_in):
    """Dense matrix for conv_transpose1d(x, g, stride=2, padding=L-2)."""
    L = len(g)
    pad = L - 2
    n_out = 2 * n_in + 2 - L
    assert n_out > 0, "input too small for sym7 synthesis"
    S = np.zeros((n_out, n_in), dtype=np.float64)
    for t in range(n_out):
        for k in range(n_in):
            j = t + pad - 2 * k
            if 0 <= j < L:
                S[t, k] = g[j]
    return S


@functools.lru_cache(maxsize=None)
def _level_matrices(hc, wc, b1, b2):
    """2-D-folded filter matrices for one level.

    Gh_bd = kron(I_b1, [S0h | S1h])        shape (b1*Ho, b1*2Hc)
    Gw_bd = kron(I_b2, [[S0w^T],[S1w^T]])  shape (b2*2Wc, b2*Wo)
    """
    gh = np.concatenate([synthesis_matrix(SYM7_REC_LO, hc),
                         synthesis_matrix(SYM7_REC_HI, hc)], axis=1)      # (Ho, 2Hc)
    gw = np.concatenate([synthesis_matrix(SYM7_REC_LO, wc),
                         synthesis_matrix(SYM7_REC_HI, wc)], axis=1).T    # (2Wc, Wo)
    gh_bd = np.kron(np.eye(b1), gh)
    gw_bd = np.kron(np.eye(b2), gw)
    return gh_bd, gw_bd


def _cdiv(a, b):
    return -(-a // b)


@functools.lru_cache(maxsize=None)
def _tpu_info():
    """(vmem_capacity_bytes, tensorcores_per_chip) with safe fallbacks."""
    vmem_cap = 128 * 1024 * 1024
    num_tc = 1
    kind = ""
    try:
        kind = jax.devices()[0].device_kind.lower()
    except Exception:
        pass
    if "v7" in kind:          # v7x: half the VMEM, two TensorCores per chip
        vmem_cap = 64 * 1024 * 1024
        num_tc = 2
    try:
        vmem_cap = int(pltpu.get_tpu_info().vmem_capacity_bytes)
    except Exception:
        pass
    return vmem_cap, num_tc


def _choose_fold(nc, hc, wc, ho, wo, in_isz, out_isz, num_tc, budget):
    """Pick the 2-D batch fold (B1 vertical x B2 horizontal) for one level.

    B2 first targets a lane-dense output (B2*Wo >= 128); B1 then grows to fill
    the VMEM budget / slice count. Non-divisor folds are allowed (last group is
    zero-padded by the caller).
    """
    def vmem_model(b1, b2):
        m, k, k2, n = b1 * ho, b1 * 2 * hc, b2 * 2 * wc, b2 * wo
        x_blk = 2 * k * k2 * in_isz                 # double-buffered input block
        out_blk = 2 * m * n * out_isz               # double-buffered output block
        ghbd = 2 * m * k * in_isz                   # constants (conservatively x2)
        gwbd = 2 * k2 * n * in_isz
        interm = m * k2 * (4 + in_isz) + m * n * 4  # f32 z + bf16 z copy + f32 y
        return x_blk + out_blk + ghbd + gwbd + interm + (2 << 20)  # + internal scratch

    def ok(b1, b2):
        return (vmem_model(b1, b2) <= budget
                and b1 * ho <= 2048 and b1 * 2 * hc <= 2048
                and b2 * 2 * wc <= 2048 and b2 * wo <= 2048)

    # Lane fold: make the output last dim >= 128 lanes (dense vst / dense writeback).
    b2 = 1
    while b2 * wo < 128 and b2 < nc and ok(1, b2 + 1):
        b2 += 1
    # Sublane fold: grow until the VMEM budget or the slice count is exhausted.
    b1 = 1
    while (b1 + 1) * b2 <= nc and ok(b1 + 1, b2):
        b1 += 1
    # v7x (2 TCs): keep >= 2 grid steps so ("parallel",) gives both cores work.
    if num_tc > 1:
        while b1 > 1 and _cdiv(nc, b1 * b2) < 2:
            b1 -= 1
        while b2 > 1 and _cdiv(nc, b1 * b2) < 2 and (b2 - 1) * wo >= 128:
            b2 -= 1
    return b1, b2, vmem_model(b1, b2)


# ---------------------------------------------------------------------------
# Pallas kernel: one synthesis level for a B1 x B2 tile of (n, c) slices.
#   x_ref    : (1, B1*2Hc, B2*2Wc)   2-D folded [[ll,hl],[lh,hh]] blocks
#   ghbd_ref : (B1*Ho, B1*2Hc)       block-diagonal row-synthesis matrix
#   gwbd_ref : (B2*2Wc, B2*Wo)       block-diagonal column-synthesis matrix
#   out_ref  : (1, B1*Ho, B2*Wo)     lane-dense output slab
# ---------------------------------------------------------------------------
def _idwt_level_kernel(x_ref, ghbd_ref, gwbd_ref, out_ref):
    x = x_ref[0]                                                          # (B1*2Hc, B2*2Wc)
    z = jnp.dot(ghbd_ref[...], x, preferred_element_type=jnp.float32)    # (B1*Ho, B2*2Wc) f32
    z = z.astype(gwbd_ref.dtype)                                          # keep bf16 MXU path
    y = jnp.dot(z, gwbd_ref[...], preferred_element_type=jnp.float32)    # (B1*Ho, B2*Wo) f32
    out_ref[0] = y.astype(out_ref.dtype)


@functools.partial(jax.jit, static_argnames=("compute_dtype", "out_dtype"))
def _sfb2d_pallas(ll, highs, *, compute_dtype, out_dtype):
    """One inverse level. ll: (N,C,Hc,Wc); highs: (N,C,3,Hc,Wc) -> (N,C,Ho,Wo)."""
    N, C, Hc, Wc = ll.shape
    Ho = 2 * Hc + 2 - _L
    Wo = 2 * Wc + 2 - _L
    NC = N * C
    in_isz = jnp.dtype(compute_dtype).itemsize
    out_isz = jnp.dtype(out_dtype).itemsize

    vmem_cap, num_tc = _tpu_info()
    # Generation-aware per-step working-set budget.
    budget = (min(vmem_cap // 3, 40 << 20) if num_tc == 1
              else min(vmem_cap // 4, 16 << 20))
    B1, B2, modeled = _choose_fold(NC, Hc, Wc, Ho, Wo, in_isz, out_isz, num_tc, budget)
    B = B1 * B2
    G = _cdiv(NC, B)
    pad = G * B - NC

    gh_bd_np, gw_bd_np = _level_matrices(Hc, Wc, B1, B2)
    gh_bd = jnp.asarray(gh_bd_np, dtype=compute_dtype)     # (B1*Ho, B1*2Hc)
    gw_bd = jnp.asarray(gw_bd_np, dtype=compute_dtype)     # (B2*2Wc, B2*Wo)

    # Assemble X = [[ll, hl],[lh, hh]] per slice wrapper-side (XLA concat), then
    # lay the B1 x B2 tile of slices out as one 2-D block per grid step
    # (layout plumbing only; all in-kernel ops stay plain 2-D dots).
    lh, hl, hh = highs[:, :, 0], highs[:, :, 1], highs[:, :, 2]
    top = jnp.concatenate([ll.astype(compute_dtype), hl.astype(compute_dtype)], axis=-1)
    bot = jnp.concatenate([lh.astype(compute_dtype), hh.astype(compute_dtype)], axis=-1)
    x = jnp.concatenate([top, bot], axis=-2).reshape(NC, 2 * Hc, 2 * Wc)
    if pad:
        x = jnp.concatenate(
            [x, jnp.zeros((pad, 2 * Hc, 2 * Wc), compute_dtype)], axis=0)
    xf = (x.reshape(G, B1, B2, 2 * Hc, 2 * Wc)
           .transpose(0, 1, 3, 2, 4)
           .reshape(G, B1 * 2 * Hc, B2 * 2 * Wc))

    M, K, K2, Nn = B1 * Ho, B1 * 2 * Hc, B2 * 2 * Wc, B2 * Wo

    # Advisory cost: useful (not block-diagonal-inflated) FLOPs, true bytes.
    flops = 2 * NC * (Ho * 2 * Hc * 2 * Wc + Ho * 2 * Wc * Wo)
    bytes_acc = (xf.size * in_isz + gh_bd.size * in_isz + gw_bd.size * in_isz
                 + G * M * Nn * out_isz)
    vmem_limit = int(min(0.75 * vmem_cap, max(32 << 20, modeled + (8 << 20))))

    y = pl.pallas_call(
        _idwt_level_kernel,
        out_shape=jax.ShapeDtypeStruct((G, M, Nn), out_dtype),
        grid=(G,),
        in_specs=[
            pl.BlockSpec((1, K, K2), lambda i: (i, 0, 0)),
            pl.BlockSpec((M, K), lambda i: (0, 0)),    # constant across steps
            pl.BlockSpec((K2, Nn), lambda i: (0, 0)),  # constant across steps
        ],
        out_specs=pl.BlockSpec((1, M, Nn), lambda i: (i, 0, 0)),
        compiler_params=pltpu.CompilerParams(
            dimension_semantics=("parallel",),
            vmem_limit_bytes=vmem_limit),
        cost_estimate=pl.CostEstimate(
            flops=flops, transcendentals=0, bytes_accessed=bytes_acc),
    )(xf, gh_bd, gw_bd)

    # Unfold (G, B1*Ho, B2*Wo) -> (N, C, Ho, Wo); drop zero-padded slices.
    y = (y.reshape(G, B1, Ho, B2, Wo)
          .transpose(0, 1, 3, 2, 4)
          .reshape(G * B, Ho, Wo))[:NC]
    return y.reshape(N, C, Ho, Wo)


def idwt_forward(x, compute_dtype=jnp.bfloat16):
    """Mirror of IDWT.forward: x = (yl, yh_list); returns reconstructed image (f32)."""
    yl, yh_list = x[0], x[1]
    ll = yl
    n_levels = len(yh_list)
    for idx, h in enumerate(yh_list[::-1]):
        # 'Unpad' added dimensions (same as DWTInverse.forward)
        if ll.shape[-2] > h.shape[-2]:
            ll = ll[..., :-1, :]
        if ll.shape[-1] > h.shape[-1]:
            ll = ll[..., :-1]
        # Intermediate levels are written in compute_dtype (bf16 perf path) to
        # halve HBM writeback; the final level is always f32.
        is_last = idx == n_levels - 1
        out_dtype = jnp.float32 if is_last else compute_dtype
        ll = _sfb2d_pallas(ll, h, compute_dtype=compute_dtype, out_dtype=out_dtype)
    return ll


# ---------------------------------------------------------------------------
# Pure-numpy reference (direct conv_transpose definition) for a sanity check.
# ---------------------------------------------------------------------------
def _ref_ct1d(x, g, axis):
    L = len(g)
    pad = L - 2
    x = np.moveaxis(np.asarray(x, dtype=np.float64), axis, -1)
    n_in = x.shape[-1]
    n_out = 2 * n_in + 2 - L
    out = np.zeros(x.shape[:-1] + (n_out,), dtype=np.float64)
    for t in range(n_out):
        for k in range(n_in):
            j = t + pad - 2 * k
            if 0 <= j < L:
                out[..., t] += x[..., k] * g[j]
    return np.moveaxis(out, -1, axis)


def _ref_idwt(yl, yh_list):
    ll = np.asarray(yl, dtype=np.float64)
    for h in yh_list[::-1]:
        h = np.asarray(h, dtype=np.float64)
        if ll.shape[-2] > h.shape[-2]:
            ll = ll[..., :-1, :]
        if ll.shape[-1] > h.shape[-1]:
            ll = ll[..., :-1]
        lh, hl, hh = h[:, :, 0], h[:, :, 1], h[:, :, 2]
        lo = _ref_ct1d(ll, SYM7_REC_LO, -2) + _ref_ct1d(lh, SYM7_REC_HI, -2)
        hi = _ref_ct1d(hl, SYM7_REC_LO, -2) + _ref_ct1d(hh, SYM7_REC_HI, -2)
        ll = _ref_ct1d(lo, SYM7_REC_LO, -1) + _ref_ct1d(hi, SYM7_REC_HI, -1)
    return ll


if __name__ == "__main__":
    key = jax.random.PRNGKey(0)
    k1, k2, k3 = jax.random.split(key, 3)

    # Coefficient shapes consistent with a 2-level sym7/'reflect' DWT of a 32x33 image:
    #   level-1 (finest) coeffs: 22x23, level-2 (coarsest, == yl): 17x18.
    N, C = 2, 4
    H1, W1 = 22, 23
    H2, W2 = 17, 18
    yl = jax.random.normal(k1, (N, C, H2, W2), dtype=jnp.float32)
    yh = [jax.random.normal(k2, (N, C, 3, H1, W1), dtype=jnp.float32),
          jax.random.normal(k3, (N, C, 3, H2, W2), dtype=jnp.float32)]

    y_ref = _ref_idwt(np.asarray(yl), [np.asarray(h) for h in yh])

    # Strict validation of the kernel math in f32.
    y32 = jax.block_until_ready(idwt_forward((yl, yh), compute_dtype=jnp.float32))
    assert y32.shape == y_ref.shape, (y32.shape, y_ref.shape)
    np.testing.assert_allclose(np.asarray(y32), y_ref, atol=1e-4, rtol=1e-4)

    # Default bf16-input / f32-accumulation performance path (looser tolerance).
    ybf = jax.block_until_ready(idwt_forward((yl, yh)))
    assert ybf.shape == y_ref.shape, (ybf.shape, y_ref.shape)
    max_err = float(np.max(np.abs(np.asarray(ybf, dtype=np.float64) - y_ref)))
    assert max_err < 0.25, f"bf16 path max abs error too large: {max_err}"

    print("KERNEL_OK")
</pallas_src>

<mosaic_0001>
module attributes {stable_mosaic.version = 11 : i64} {
  func.func @_idwt_level_kernel(%arg0: i32, %arg1: memref<1x34x216xf32, #tpu.memory_space<vmem>>, %arg2: memref<22x34xf32, #tpu.memory_space<vmem>>, %arg3: memref<216x144xf32, #tpu.memory_space<vmem>>, %arg4: memref<1x22x144xf32, #tpu.memory_space<vmem>>) attributes {dimension_semantics = [#tpu.dimension_semantics<parallel>], iteration_bounds = array<i64: 2>, scalar_prefetch = 0 : i64, scratch_operands = 0 : i64, tpu.core_type = #tpu.core_type<tc>, window_params = [{transform_indices = @transform_0, window_bounds = array<i64: 1, 34, 216>}, {pipeline_mode = #tpu.pipeline_mode<synchronous>, transform_indices = @transform_1, window_bounds = array<i64: 22, 34>}, {pipeline_mode = #tpu.pipeline_mode<synchronous>, transform_indices = @transform_2, window_bounds = array<i64: 216, 144>}, {transform_indices = @transform_3, window_bounds = array<i64: 1, 22, 144>}]} {
    %c0 = arith.constant 0 : index
    %c0_0 = arith.constant 0 : index
    %c0_1 = arith.constant 0 : index
    %0 = vector.load %arg1[%c0, %c0_0, %c0_1] : memref<1x34x216xf32, #tpu.memory_space<vmem>>, vector<1x34x216xf32>
    %1 = vector.shape_cast %0 : vector<1x34x216xf32> to vector<34x216xf32>
    %c0_2 = arith.constant 0 : index
    %c0_3 = arith.constant 0 : index
    %2 = vector.load %arg2[%c0_2, %c0_3] : memref<22x34xf32, #tpu.memory_space<vmem>>, vector<22x34xf32>
    %cst = arith.constant dense<0.000000e+00> : vector<22x216xf32>
    %3 = tpu.matmul %2, %1, %cst {dimension_numbers = #tpu.dot_dimension_numbers<[1], [0], [0], [1], [0, 0, 1, 1], [], []>} : vector<22x34xf32>, vector<34x216xf32>, vector<22x216xf32> -> vector<22x216xf32>
    %c0_4 = arith.constant 0 : index
    %c0_5 = arith.constant 0 : index
    %4 = vector.load %arg3[%c0_4, %c0_5] : memref<216x144xf32, #tpu.memory_space<vmem>>, vector<216x144xf32>
    %cst_6 = arith.constant dense<0.000000e+00> : vector<22x144xf32>
    %5 = tpu.matmul %3, %4, %cst_6 {dimension_numbers = #tpu.dot_dimension_numbers<[1], [0], [0], [1], [0, 0, 1, 1], [], []>} : vector<22x216xf32>, vector<216x144xf32>, vector<22x144xf32> -> vector<22x144xf32>
    %c0_7 = arith.constant 0 : index
    %c0_8 = arith.constant 0 : index
    %c0_9 = arith.constant 0 : index
    %6 = vector.load %arg4[%c0_7, %c0_8, %c0_9] : memref<1x22x144xf32, #tpu.memory_space<vmem>>, vector<1x22x144xf32>
    %7 = vector.shape_cast %6 : vector<1x22x144xf32> to vector<22x144xf32>
    %8 = vector.shape_cast %5 : vector<22x144xf32> to vector<1x22x144xf32>
    tpu.vector_store %arg4[%c0_7, %c0_8, %c0_9], %8 {strides = array<i32>} : memref<1x22x144xf32, #tpu.memory_space<vmem>>, vector<1x22x144xf32>,
    return
  }
  func.func @transform_0(%arg0: i32) -> (i32, i32, i32) {
    %c0_i32 = arith.constant 0 : i32
    %c0_i32_0 = arith.constant 0 : i32
    %c0_i32_1 = arith.constant 0 : i32
    return %arg0, %c0_i32, %c0_i32_0 : i32, i32, i32
  }
  func.func @transform_1(%arg0: i32) -> (i32, i32) {
    %c0_i32 = arith.constant 0 : i32
    %c0_i32_0 = arith.constant 0 : i32
    %c0_i32_1 = arith.constant 0 : i32
    return %c0_i32, %c0_i32_0 : i32, i32
  }
  func.func @transform_2(%arg0: i32) -> (i32, i32) {
    %c0_i32 = arith.constant 0 : i32
    %c0_i32_0 = arith.constant 0 : i32
    %c0_i32_1 = arith.constant 0 : i32
    return %c0_i32, %c0_i32_0 : i32, i32
  }
  func.func @transform_3(%arg0: i32) -> (i32, i32, i32) {
    %c0_i32 = arith.constant 0 : i32
    %c0_i32_0 = arith.constant 0 : i32
    %c0_i32_1 = arith.constant 0 : i32
    return %arg0, %c0_i32, %c0_i32_0 : i32, i32, i32
  }
}

</mosaic_0001>

<llo_original>
// kernel: _sfb2d_pallas.1
$region0: #{_sfb2d_pallas.1}
  #allocation0 [shape = 'u32[]', space=smem, size = 0x4, offset = 0x4, fixed_abs, tag = 'smem constant byte address 0x4 - core index']
  #allocation1 [shape = 'u32[144,128]{1,0:T(1,128)}', space=vmem, size = 0x12000, scoped, tag = 'internal scratch']
  %s0 = inlined_call_operand.vmem [shape: f32[2,34,216], index: 0, kind: input, shape index: {}]
  %s1 = inlined_call_operand.vmem [shape: f32[22,34], index: 1, kind: input, shape index: {}]
  %s2 = inlined_call_operand.vmem [shape: f32[216,144], index: 2, kind: input, shape index: {}]
  %s3 = inlined_call_operand.vmem [shape: f32[2,22,144], index: 3, kind: output, shape index: {}]
  %s4 = sld [smem:[#allocation0]]
  $region45: #{_sfb2d_pallas.1} parent=0
    _
  %s6 = ssub.s32 1, %s4
  %s7 = scalar_select 0, %s6, %s4
  loop: start=0, step=1, limit=4
  $region2: #{_sfb2d_pallas.1} parent=0 // loop_pre_header
    _
  $region3: #{_sfb2d_pallas.1} parent=0 // loop_header
    %s9 = sphi 0, %s13
    %p10 = scmp.ge.s32.totalorder %s9, 4
    %s19 = sphi 0, %s21
    %s22 = sphi 0, %s19
    %s23 = sphi 0, %s22
    %s39 = sphi 0, %s23
    %s43 = sphi 0, %s43
    %s45 = sphi 0, %s43
    %s46 = sphi 0, %s45
    %s60 = sphi 0, %s46
    %s64 = sphi 0, %s64
    %s66 = sphi 0, %s64
    %s67 = sphi 0, %s66
    %s81 = sphi 0, %s67
    %s87 = sphi 0, %s89
    %s90 = sphi 0, %s87
    %s91 = sphi 0, %s90
    %s107 = sphi 0, %s91
  $region4: #{_sfb2d_pallas.1} parent=0 // loop_header_branch
    %12 = sbr.rel (%p10) target = $region8
  $region5: #{_sfb2d_pallas.1} parent=0 // loop_body
    %s14 = ssub.s32 %s9, 1
    %s15 = ssub.s32 %s9, 2
    %s16 = sadd.s32 %s9, 1
    %s17 = ssub.s32 %s9, %s16
    %p18 = scmp.eq.s32.totalorder %s17, 0
    %s20 = sadd.s32 %s19, 1
    %s21 = scalar_select %p18, %s19, %s20
    %p24 = pneg %p18
    %p25 = scmp.eq.s32.totalorder %s9, 1
    %p26 = por %p24, %p25
    %p27 = scmp.ne.s32.totalorder %s19, %s22
    %p28 = scmp.eq.s32.totalorder %s9, 0
    %p29 = por %p27, %p28
    %p30 = scmp.ne.s32.totalorder %s19, %s22
    %p31 = scmp.eq.s32.totalorder %s14, 1
    %p32 = por %p30, %p31
    %p33 = scmp.ne.s32.totalorder %s22, %s23
    %p34 = scmp.eq.s32.totalorder %s14, 0
    %p35 = por %p33, %p34
    %p36 = scmp.ne.s32.totalorder %s22, %s23
    %p37 = scmp.eq.s32.totalorder %s15, 1
    %p38 = por %p36, %p37
    %p40 = scmp.ne.s32.totalorder %s23, %s39
    %p41 = scmp.eq.s32.totalorder %s15, 0
    %p42 = por %p40, %p41
    %s44 = sadd.s32 %s43, 1
    %p47 = scmp.eq.s32.totalorder %s9, 1
    %p48 = scmp.ne.s32.totalorder %s43, %s45
    %p49 = scmp.eq.s32.totalorder %s9, 0
    %p50 = por %p48, %p49
    %p51 = scmp.ne.s32.totalorder %s43, %s45
    %p52 = scmp.eq.s32.totalorder %s14, 1
    %p53 = por %p51, %p52
    %p54 = scmp.ne.s32.totalorder %s45, %s46
    %p55 = scmp.eq.s32.totalorder %s14, 0
    %p56 = por %p54, %p55
    %p57 = scmp.ne.s32.totalorder %s45, %s46
    %p58 = scmp.eq.s32.totalorder %s15, 1
    %p59 = por %p57, %p58
    %p61 = scmp.ne.s32.totalorder %s46, %s60
    %p62 = scmp.eq.s32.totalorder %s15, 0
    %p63 = por %p61, %p62
    %s65 = sadd.s32 %s64, 1
    %p68 = scmp.eq.s32.totalorder %s9, 1
    %p69 = scmp.ne.s32.totalorder %s64, %s66
    %p70 = scmp.eq.s32.totalorder %s9, 0
    %p71 = por %p69, %p70
    %p72 = scmp.ne.s32.totalorder %s64, %s66
    %p73 = scmp.eq.s32.totalorder %s14, 1
    %p74 = por %p72, %p73
    %p75 = scmp.ne.s32.totalorder %s66, %s67
    %p76 = scmp.eq.s32.totalorder %s14, 0
    %p77 = por %p75, %p76
    %p78 = scmp.ne.s32.totalorder %s66, %s67
    %p79 = scmp.eq.s32.totalorder %s15, 1
    %p80 = por %p78, %p79
    %p82 = scmp.ne.s32.totalorder %s67, %s81
    %p83 = scmp.eq.s32.totalorder %s15, 0
    %p84 = por %p82, %p83
    %s85 = ssub.s32 %s9, %s16
    %p86 = scmp.eq.s32.totalorder %s85, 0
    %s88 = sadd.s32 %s87, 1
    %s89 = scalar_select %p86, %s87, %s88
    %p92 = pneg %p86
    %p93 = scmp.eq.s32.totalorder %s9, 1
    %p94 = por %p92, %p93
    %p95 = scmp.ne.s32.totalorder %s87, %s90
    %p96 = scmp.eq.s32.totalorder %s9, 0
    %p97 = por %p95, %p96
    %p98 = scmp.ne.s32.totalorder %s87, %s90
    %p99 = scmp.eq.s32.totalorder %s14, 1
    %p100 = por %p98, %p99
    %p101 = scmp.ne.s32.totalorder %s90, %s91
    %p102 = scmp.eq.s32.totalorder %s14, 0
    %p103 = por %p101, %p102
    %p104 = scmp.ne.s32.totalorder %s90, %s91
    %p105 = scmp.eq.s32.totalorder %s15, 1
    %p106 = por %p104, %p105
    %p108 = scmp.ne.s32.totalorder %s91, %s107
    %p109 = scmp.eq.s32.totalorder %s15, 0
    %p110 = por %p108, %p109
    %p111 = scmp.le.s32.totalorder 1, %s9
    %p112 = scmp.lt.s32.totalorder %s9, 3
    %p113 = pnand %p111, %p112
    %p114 = pneg %p113
    // Predicated region
    $region9: #{_sfb2d_pallas.1} parent=5 // pred_check
      _
    $region10: #{_sfb2d_pallas.1} parent=5 // pred_check_branch
      %116 = sbr.rel (%p113) target = $region12
    $region11: #{_sfb2d_pallas.1} parent=5 // pred_region
      %s117 = ssub.s32 %s9, 1
      // Predicated region
      $region13: #{_sfb2d_pallas.1} parent=11 // pred_check
        %p118 = pneg %p56
      $region14: #{_sfb2d_pallas.1} parent=11 // pred_check_branch
        %120 = sbr.rel (%p118) target = $region16
      $region15: #{_sfb2d_pallas.1} parent=11 // pred_region
        _
      $region16: #{_sfb2d_pallas.1} parent=11 // pred_fallthru
        _
      // Predicated region
      $region17: #{_sfb2d_pallas.1} parent=11 // pred_check
        %p121 = pneg %p77
      $region18: #{_sfb2d_pallas.1} parent=11 // pred_check_branch
        %123 = sbr.rel (%p121) target = $region20
      $region19: #{_sfb2d_pallas.1} parent=11 // pred_region
        _
      $region20: #{_sfb2d_pallas.1} parent=11 // pred_fallthru
        _
    $region12: #{_sfb2d_pallas.1} parent=5 // pred_fallthru
      _
    %p124 = scmp.lt.s32.totalorder %s9, 2
    // Predicated region
    $region21: #{_sfb2d_pallas.1} parent=5 // pred_check
      %p125 = pneg %p124
    $region22: #{_sfb2d_pallas.1} parent=5 // pred_check_branch
      %127 = sbr.rel (%p125) target = $region24
    $region23: #{_sfb2d_pallas.1} parent=5 // pred_region
      // Predicated region
      $region25: #{_sfb2d_pallas.1} parent=23 // pred_check
        %p128 = pneg %p29
      $region26: #{_sfb2d_pallas.1} parent=23 // pred_check_branch
        %130 = sbr.rel (%p128) target = $region28
      $region27: #{_sfb2d_pallas.1} parent=23 // pred_region
        %p131 = scmp.lt.s32.totalorder %s9, 1
        %s132 = scalar_select %p131, %s9, 1
        %s133 = smul.addr %s132, 10
        %s134 = smul.addr %s133, 8
        %s135 = scalar_lea.vmem %s0, %s134
      $region28: #{_sfb2d_pallas.1} parent=23 // pred_fallthru
        _
    $region24: #{_sfb2d_pallas.1} parent=5 // pred_fallthru
      _
    %p136 = scmp.le.s32.totalorder 1, %s9
    %p137 = scmp.lt.s32.totalorder %s9, 3
    %p138 = pnand %p136, %p137
    %p139 = pneg %p138
    // Predicated region
    $region29: #{_sfb2d_pallas.1} parent=5 // pred_check
      _
    $region30: #{_sfb2d_pallas.1} parent=5 // pred_check_branch
      %141 = sbr.rel (%p138) target = $region32
    $region31: #{_sfb2d_pallas.1} parent=5 // pred_region
      %s142 = ssub.s32 %s9, 1
      %p143 = scmp.lt.s32.totalorder %s14, 1
      %s144 = scalar_select %p143, %s14, 1
      %s145 = smul.addr %s144, 10
      %s146 = smul.addr %s145, 8
      %s147 = scalar_lea.vmem %s0, %s146
      %p148 = pneg %p35
      %p149 = pneg %p32
      %p150 = pneg %p56
      %p151 = pneg %p53
      %p152 = pneg %p77
      %p153 = pneg %p74
      %p154 = pneg %p103
      %p155 = pneg %p100
      %p156 = scmp.lt.s32.totalorder %s14, 1
      %s157 = scalar_select %p156, %s14, 1
      %s158 = smul.addr %s157, 6
      %s159 = smul.addr %s158, 8
      %s160 = scalar_lea.vmem %s3, %s159
      %p161 = scmp.lt.s32.totalorder %s14, 1
      %s162 = scalar_select %p161, %s14, 1
      %s163 = smul.addr %s162, 10
      %s164 = smul.addr %s163, 8
      %s165 = scalar_lea.vmem %s0, %s164
      %p166 = scmp.lt.s32.totalorder %s14, 1
      %s167 = scalar_select %p166, %s14, 1
      %s168 = smul.addr %s167, 6
      %s169 = smul.addr %s168, 8
      %s170 = scalar_lea.vmem %s3, %s169
      %v171 = vld [vmem:[%s165] sm:$0xff]
      %v172 = vld [vmem:[%s165 + $0x8] sm:$0xff]
      %v173 = vld [vmem:[%s165 + $0x10] sm:$0xff]
      %v174 = vld [vmem:[%s165 + $0x18] sm:$0xff]
      %v175 = vld [vmem:[%s165 + $0x20] sm:$0xff]
      %v176 = vld [vmem:[%s165 + $0x28] sm:$0xff]
      %v177 = vld [vmem:[%s165 + $0x30] sm:$0xff]
      %v178 = vld [vmem:[%s165 + $0x38] sm:$0xff]
      %v179 = vld [vmem:[%s165 + $0x40] sm:$0x3]
      %v180 = vld [vmem:[%s165 + $0x48] sm:$0x3]
      %v181 = vld [vmem:[%s1] sm:$0xff]
      %v182 = vld [vmem:[%s1 + $0x8] sm:$0xff]
      %v183 = vld [vmem:[%s1 + $0x10] sm:$0x3f]
      %vm184 = vcmask 277504
      %v186 = vsel %vm184, %v181, 0
      %v189 = vsel %vm184, %v182, 0
      %v192 = vsel %vm184, %v183, 0
      %vm194 = vcmask 1041408
      %v196 = vsel %vm194, %v179, 0
      %v199 = vsel %vm194, %v180, 0
      %201 = vmatprep.subr.mxu0 %v172
      %202 = vmatpush1.msra.mxu0 %v171
      %203 = vmatprep.subr.mxu0 %v174
      %204 = vmatpush1.msra.mxu0 %v173
      %205 = vmatprep.subr.mxu0 %v176
      %206 = vmatpush1.msra.mxu0 %v175
      %207 = vmatprep.subr.mxu0 %v178
      %208 = vmatpush1.msra.mxu0 %v177
      %209 = vmatprep.subr.mxu0 %v199
      %210 = vmatpush1.msra.mxu0 %v196
      %211 = vmatprep.subr.mxu0 0.0
      %212 = vmatpush1.msra.mxu0 0.0
      %213 = vmatprep.subr.mxu0 0.0
      %214 = vmatpush1.msra.mxu0 0.0
      %215 = vmatprep.subr.mxu0 0.0
      %216 = vmatpush1.msra.mxu0 0.0
      %217 = vmatprep.subr.mxu0 0.0
      %218 = vmatpush1.msra.mxu0 0.0
      %219 = vmatprep.subr.mxu0 0.0
      %220 = vmatpush1.msra.mxu0 0.0
      %221 = vmatprep.subr.mxu0 0.0
      %222 = vmatpush1.msra.mxu0 0.0
      %223 = vmatprep.subr.mxu0 0.0
      %224 = vmatpush1.msra.mxu0 0.0
      %225 = vmatprep.subr.mxu0 0.0
      %226 = vmatpush1.msra.mxu0 0.0
      %227 = vmatprep.subr.mxu0 0.0
      %228 = vmatpush1.msra.mxu0 0.0
      %229 = vmatprep.subr.mxu0 0.0
      %230 = vmatpush1.msra.mxu0 0.0
      %231 = vmatprep.subr.mxu0 0.0
      %232 = vmatpush1.msra.mxu0 0.0
      %233 = vmatprep.subr.mxu0 0.0
      %234 = vmatpush1.msra.mxu0 0.0
      %235 = vmatprep.subr.mxu0 0.0
      %236 = vmatpush1.msra.mxu0 0.0
      %237 = vmatprep.subr.mxu0 0.0
      %238 = vmatpush1.msra.mxu0 0.0
      %239 = vmatprep.subr.mxu0 0.0
      %240 = vmatpush1.msra.mxu0 0.0
      %241 = vmatprep.subr.mxu0 0.0
      %242 = vmatpush1.msra.mxu0 0.0
      %243 = vmatprep.subr.mxu0 0.0
      %244 = vmatpush1.msra.mxu0 0.0
      %245 = vmatprep.subr.mxu0 0.0
      %246 = vmatpush1.msra.mxu0 0.0
      %247 = vmatprep.subr.mxu0 0.0
      %248 = vmatpush1.msra.mxu0 0.0
      %249 = vmatprep.subr.mxu0 0.0
      %250 = vmatpush1.msra.mxu0 0.0
      %251 = vmatprep.subr.mxu0 0.0
      %252 = vmatpush1.msra.mxu0 0.0
      %253 = vmatprep.subr.mxu0 0.0
      %254 = vmatpush1.msra.mxu0 0.0
      %255 = vmatprep.subr.mxu0 0.0
      %256 = vmatpush1.msra.mxu0 0.0
      %257 = vmatprep.subr.mxu0 0.0
      %258 = vmatpush1.msra.mxu0 0.0
      %259 = vmatprep.subr.mxu0 0.0
      %260 = vmatpush1.msra.mxu0 0.0
      %261 = vmatprep.subr.mxu0 0.0
      %262 = vmatpush1.msra.mxu0 0.0
      %263 = vmatprep.subr.mxu0 0.0
      %264 = vmatpush1.msra.mxu0 0.0
      %265 = vmatprep.mubr.f32.mxu0 0.0
      %266 = vmatmul.mubr.f32.gmra.mrb[0].mxu0 %v186
      %v267 = vpop.f32.mrb[0].mxu0
      %v268 = vadd.f32 0.0, %v267
      %v269 = vpop.f32.mrb[0].mxu0
      %v270 = vadd.f32 0.0, %v269
      %271 = vmatprep.mubr.f32.mxu0 0.0
      %272 = vmatmul.mubr.f32.gmra.mrb[0].mxu0 %v189
      %v273 = vpop.f32.mrb[0].mxu0
      %v274 = vadd.f32 0.0, %v273
      %v275 = vpop.f32.mrb[0].mxu0
      %v276 = vadd.f32 0.0, %v275
      %277 = vmatprep.mubr.f32.mxu0 0.0
      %278 = vmatmul.mubr.f32.gmra.mrb[0].mxu0 %v192
      %v279 = vpop.f32.mrb[0].mxu0
      %v280 = vadd.f32 0.0, %v279
      %v281 = vpop.f32.mrb[0].mxu0
      %v282 = vadd.f32 0.0, %v281
      %283 = vdwg.mxu0
      %v284 = vld [vmem:[%s2] sm:$0xff]
      %v285 = vld [vmem:[%s2 + $0x8] sm:$0xff]
      %v286 = vld [vmem:[%s2 + $0x10] sm:$0xff]
      %v287 = vld [vmem:[%s2 + $0x18] sm:$0xff]
      %v288 = vld [vmem:[%s2 + $0x20] sm:$0xff]
      %v289 = vld [vmem:[%s2 + $0x28] sm:$0xff]
      %v290 = vld [vmem:[%s2 + $0x30] sm:$0xff]
      %v291 = vld [vmem:[%s2 + $0x38] sm:$0xff]
      %v292 = vld [vmem:[%s2 + $0x40] sm:$0xff]
      %v293 = vld [vmem:[%s2 + $0x48] sm:$0xff]
      %v294 = vld [vmem:[%s2 + $0x50] sm:$0xff]
      %v295 = vld [vmem:[%s2 + $0x58] sm:$0xff]
      %v296 = vld [vmem:[%s2 + $0x60] sm:$0xff]
      %v297 = vld [vmem:[%s2 + $0x68] sm:$0xff]
      %v298 = vld [vmem:[%s2 + $0x70] sm:$0xff]
      %v299 = vld [vmem:[%s2 + $0x78] sm:$0xff]
      %v300 = vld [vmem:[%s2 + $0x80] sm:$0xff]
      %v301 = vld [vmem:[%s2 + $0x88] sm:$0xff]
      %v302 = vld [vmem:[%s2 + $0x90] sm:$0xff]
      %v303 = vld [vmem:[%s2 + $0x98] sm:$0xff]
      %v304 = vld [vmem:[%s2 + $0xa0] sm:$0xff]
      %v305 = vld [vmem:[%s2 + $0xa8] sm:$0xff]
      %v306 = vld [vmem:[%s2 + $0xb0] sm:$0xff]
      %v307 = vld [vmem:[%s2 + $0xb8] sm:$0xff]
      %v308 = vld [vmem:[%s2 + $0xc0] sm:$0xff]
      %v309 = vld [vmem:[%s2 + $0xc8] sm:$0xff]
      %v310 = vld [vmem:[%s2 + $0xd0] sm:$0xff]
      %v311 = vld [vmem:[%s2 + $0xd8] sm:$0xff]
      %v312 = vld [vmem:[%s2 + $0xe0] sm:$0xff]
      %v313 = vld [vmem:[%s2 + $0xe8] sm:$0xff]
      %v314 = vld [vmem:[%s2 + $0xf0] sm:$0xff]
      %v315 = vld [vmem:[%s2 + $0xf8] sm:$0xff]
      %v316 = vld [vmem:[%s2 + $0x100] sm:$0xff]
      %v317 = vld [vmem:[%s2 + $0x108] sm:$0xff]
      %v318 = vld [vmem:[%s2 + $0x110] sm:$0xff]
      %v319 = vld [vmem:[%s2 + $0x118] sm:$0xff]
      %v320 = vld [vmem:[%s2 + $0x120] sm:$0xff]
      %v321 = vld [vmem:[%s2 + $0x128] sm:$0xff]
      %v322 = vld [vmem:[%s2 + $0x130] sm:$0xff]
      %v323 = vld [vmem:[%s2 + $0x138] sm:$0xff]
      %v324 = vld [vmem:[%s2 + $0x140] sm:$0xff]
      %v325 = vld [vmem:[%s2 + $0x148] sm:$0xff]
      %v326 = vld [vmem:[%s2 + $0x150] sm:$0xff]
      %v327 = vld [vmem:[%s2 + $0x158] sm:$0xff]
      %v328 = vld [vmem:[%s2 + $0x160] sm:$0xff]
      %v329 = vld [vmem:[%s2 + $0x168] sm:$0xff]
      %v330 = vld [vmem:[%s2 + $0x170] sm:$0xff]
      %v331 = vld [vmem:[%s2 + $0x178] sm:$0xff]
      %v332 = vld [vmem:[%s2 + $0x180] sm:$0xff]
      %v333 = vld [vmem:[%s2 + $0x188] sm:$0xff]
      %v334 = vld [vmem:[%s2 + $0x190] sm:$0xff]
      %v335 = vld [vmem:[%s2 + $0x198] sm:$0xff]
      %v336 = vld [vmem:[%s2 + $0x1a0] sm:$0xff]
      %v337 = vld [vmem:[%s2 + $0x1a8] sm:$0xff]
      %vm338 = vcmask 719872
      %v340 = vsel %vm338, %v270, 0
      %v343 = vsel %vm338, %v276, 0
      %v346 = vsel %vm338, %v282, 0
      %348 = vmatprep.subr.mxu0 %v285
      %349 = vmatpush1.msra.mxu0 %v284
      %350 = vmatprep.subr.mxu0 %v287
      %351 = vmatpush1.msra.mxu0 %v286
      %352 = vmatprep.subr.mxu0 %v289
      %353 = vmatpush1.msra.mxu0 %v288
      %354 = vmatprep.subr.mxu0 %v291
      %355 = vmatpush1.msra.mxu0 %v290
      %356 = vmatprep.subr.mxu0 %v293
      %357 = vmatpush1.msra.mxu0 %v292
      %358 = vmatprep.subr.mxu0 %v295
      %359 = vmatpush1.msra.mxu0 %v294
      %360 = vmatprep.subr.mxu0 %v297
      %361 = vmatpush1.msra.mxu0 %v296
      %362 = vmatprep.subr.mxu0 %v299
      %363 = vmatpush1.msra.mxu0 %v298
      %364 = vmatprep.subr.mxu0 %v301
      %365 = vmatpush1.msra.mxu0 %v300
      %366 = vmatprep.subr.mxu0 %v303
      %367 = vmatpush1.msra.mxu0 %v302
      %368 = vmatprep.subr.mxu0 %v305
      %369 = vmatpush1.msra.mxu0 %v304
      %370 = vmatprep.subr.mxu0 %v307
      %371 = vmatpush1.msra.mxu0 %v306
      %372 = vmatprep.subr.mxu0 %v309
      %373 = vmatpush1.msra.mxu0 %v308
      %374 = vmatprep.subr.mxu0 %v311
      %375 = vmatpush1.msra.mxu0 %v310
      %376 = vmatprep.subr.mxu0 %v313
      %377 = vmatpush1.msra.mxu0 %v312
      %378 = vmatprep.subr.mxu0 %v315
      %379 = vmatpush1.msra.mxu0 %v314
      %380 = vmatprep.subr.mxu0 %v317
      %381 = vmatpush1.msra.mxu0 %v316
      %382 = vmatprep.subr.mxu0 %v319
      %383 = vmatpush1.msra.mxu0 %v318
      %384 = vmatprep.subr.mxu0 %v321
      %385 = vmatpush1.msra.mxu0 %v320
      %386 = vmatprep.subr.mxu0 %v323
      %387 = vmatpush1.msra.mxu0 %v322
      %388 = vmatprep.subr.mxu0 %v325
      %389 = vmatpush1.msra.mxu0 %v324
      %390 = vmatprep.subr.mxu0 %v327
      %391 = vmatpush1.msra.mxu0 %v326
      %392 = vmatprep.subr.mxu0 %v329
      %393 = vmatpush1.msra.mxu0 %v328
      %394 = vmatprep.subr.mxu0 %v331
      %395 = vmatpush1.msra.mxu0 %v330
      %396 = vmatprep.subr.mxu0 %v333
      %397 = vmatpush1.msra.mxu0 %v332
      %398 = vmatprep.subr.mxu0 %v335
      %399 = vmatpush1.msra.mxu0 %v334
      %400 = vmatprep.subr.mxu0 %v337
      %401 = vmatpush1.msra.mxu0 %v336
      %402 = vmatprep.subr.mxu0 0.0
      %403 = vmatpush1.msra.mxu0 0.0
      %404 = vmatprep.subr.mxu0 0.0
      %405 = vmatpush1.msra.mxu0 0.0
      %406 = vmatprep.subr.mxu0 0.0
      %407 = vmatpush1.msra.mxu0 0.0
      %408 = vmatprep.subr.mxu0 0.0
      %409 = vmatpush1.msra.mxu0 0.0
      %410 = vmatprep.subr.mxu0 0.0
      %411 = vmatpush1.msra.mxu0 0.0
      %412 = vmatprep.mubr.f32.mxu0 %v340
      %413 = vmatmul.mubr.f32.gmra.mrb[0].mxu0 %v268
      %v414 = vpop.f32.mrb[0].mxu0
      %v415 = vadd.f32 0.0, %v414
      %v416 = vpop.f32.mrb[0].mxu0
      %v417 = vadd.f32 0.0, %v416
      %418 = vmatprep.mubr.f32.mxu0 %v343
      %419 = vmatmul.mubr.f32.gmra.mrb[0].mxu0 %v274
      %v420 = vpop.f32.mrb[0].mxu0
      %v421 = vadd.f32 0.0, %v420
      %v422 = vpop.f32.mrb[0].mxu0
      %v423 = vadd.f32 0.0, %v422
      %424 = vmatprep.mubr.f32.mxu0 %v346
      %425 = vmatmul.mubr.f32.gmra.mrb[0].mxu0 %v280
      %v426 = vpop.f32.mrb[0].mxu0
      %v427 = vadd.f32 0.0, %v426
      %v428 = vpop.f32.mrb[0].mxu0
      %v429 = vadd.f32 0.0, %v428
      %430 = vdwg.mxu0
      %431 = vst [vmem:[%s170] sm:$0xff] %v415
      %vm432 = vcmask 130048
      %433 = vst.msk [vmem:[%s170 + $0x8] sm:$0xff] %vm432, %v417
      %434 = vst [vmem:[%s170 + $0x10] sm:$0xff] %v421
      %435 = vst.msk [vmem:[%s170 + $0x18] sm:$0xff] %vm432, %v423
      %436 = vst [vmem:[%s170 + $0x20] sm:$0x3f] %v427
      %vm437 = vcmask 128000
      %438 = vst.msk [vmem:[%s170 + $0x28] sm:$0x3f] %vm437, %v429
      %p439 = scmp.lt.s32.totalorder %s14, 1
      %s440 = scalar_select %p439, %s14, 1
      %s441 = smul.addr %s440, 6
      %s442 = smul.addr %s441, 8
      %s443 = scalar_lea.vmem %s3, %s442
      // Predicated region
      $region33: #{_sfb2d_pallas.1} parent=31 // pred_check
        %p444 = pneg %p100
      $region34: #{_sfb2d_pallas.1} parent=31 // pred_check_branch
        %446 = sbr.rel (%p444) target = $region36
      $region35: #{_sfb2d_pallas.1} parent=31 // pred_region
        _
      $region36: #{_sfb2d_pallas.1} parent=31 // pred_fallthru
        _
    $region32: #{_sfb2d_pallas.1} parent=5 // pred_fallthru
      _
    %p447 = scmp.le.s32.totalorder 2, %s9
    // Predicated region
    $region37: #{_sfb2d_pallas.1} parent=5 // pred_check
      %p448 = pneg %p447
    $region38: #{_sfb2d_pallas.1} parent=5 // pred_check_branch
      %450 = sbr.rel (%p448) target = $region40
    $region39: #{_sfb2d_pallas.1} parent=5 // pred_region
      %s451 = ssub.s32 %s9, 2
      // Predicated region
      $region41: #{_sfb2d_pallas.1} parent=39 // pred_check
        %p452 = pneg %p106
      $region42: #{_sfb2d_pallas.1} parent=39 // pred_check_branch
        %454 = sbr.rel (%p452) target = $region44
      $region43: #{_sfb2d_pallas.1} parent=39 // pred_region
        %p455 = scmp.lt.s32.totalorder %s15, 1
        %s456 = scalar_select %p455, %s15, 1
        %s457 = smul.addr %s456, 6
        %s458 = smul.addr %s457, 8
        %s459 = scalar_lea.vmem %s3, %s458
      $region44: #{_sfb2d_pallas.1} parent=39 // pred_fallthru
        _
    $region40: #{_sfb2d_pallas.1} parent=5 // pred_fallthru
      _
  $region6: #{_sfb2d_pallas.1} parent=0 // loop_footer
    %s13 = sadd.s32 1, %s9
  $region7: #{_sfb2d_pallas.1} parent=0 // loop_footer_branch
    %8 = sbr.rel target = $region3
  $region8: #{_sfb2d_pallas.1} parent=0 // loop_exit
    _

</llo_original>
